<compile_context>
chip_gen: v6e
topology: v6e:2x2x1
jax: 0.10.0
libtpu: 0.0.40
codegen_flags: <defaults>
</compile_context>

<pallas_src>
import functools

import jax
import jax.numpy as jnp
from jax.experimental import pallas as pl
from jax.experimental.pallas import tpu as pltpu

_EPS = 1e-8
_LANE = 128
_SUBLANE = 8
_MAX_BLOCK_ROWS = 2048  # (2048, 128) f32 tile = 1 MiB per input per buffer


def _num_tensorcores():
    """2 on v7x (two TensorCores per chip), 1 on v5e/v6e. Conservative default 1."""
    try:
        kind = jax.devices()[0].device_kind.lower()
    except Exception:
        return 1
    if ("v7" in kind) or ("7x" in kind):
        return 2
    return 1


def _irmse_partial_kernel(fake_ref, real_ref, out_ref, acc_sq, acc_cnt,
                          *, rows_total, tiles_per_part, block_rows):
    p = pl.program_id(0)   # partition (sharded across TCs on v7x)
    i = pl.program_id(1)   # tile within partition (reduction axis)

    @pl.when(i == 0)
    def _():
        acc_sq[...] = jnp.zeros_like(acc_sq)
        acc_cnt[...] = jnp.zeros_like(acc_cnt)

    # Native-dtype load, cast to f32 in-kernel (cheap VPU work under the DMA).
    real = real_ref[...].astype(jnp.float32)
    fake = fake_ref[...].astype(jnp.float32)
    diff = real - fake
    base_mask = real > 0.0

    def accumulate(mask):
        sq = jnp.where(mask, diff * diff, 0.0)
        cnt = mask.astype(jnp.float32)
        # Sublane-aligned regroup (block_rows,128)->(block_rows//8,8,128); the
        # leading-axis sum lowers to plain vreg adds (VPU only, no per-step XLU),
        # then a single add into the vreg-sized accumulators.
        acc_sq[...] += jnp.sum(sq.reshape(-1, _SUBLANE, _LANE), axis=0)
        acc_cnt[...] += jnp.sum(cnt.reshape(-1, _SUBLANE, _LANE), axis=0)

    # Unclamped global start row of this tile.  Interior tiles are always full
    # and skip the iota mask entirely; edge tiles (partial last tile, phantom
    # clamped tiles) mask rows >= rows_total (Pallas does not zero-fill
    # out-of-range block regions, so this mask must stay on edge tiles).
    block_start = (p * tiles_per_part + i) * block_rows
    is_full = block_start + block_rows <= rows_total

    @pl.when(is_full)
    def _():
        accumulate(base_mask)

    @pl.when(jnp.logical_not(is_full))
    def _():
        row_ids = block_start + jax.lax.broadcasted_iota(
            jnp.int32, (block_rows, _LANE), 0)
        accumulate(jnp.logical_and(base_mask, row_ids < rows_total))

    # One tiny cross-lane/sublane reduce (one vreg each) per partition.
    @pl.when(i == pl.num_programs(1) - 1)
    def _():
        s = jnp.sum(acc_sq[...])
        c = jnp.sum(acc_cnt[...])
        sel = jax.lax.broadcasted_iota(jnp.int32, (1, 2, _LANE), 1)
        out_ref[...] = jnp.where(sel == 0, s, c).astype(jnp.float32)


@jax.jit
def irmse(fake, real):
    """Masked RMSE over elements where real > 0. Returns a scalar f32."""
    f = fake.reshape(-1)
    r = real.reshape(-1)
    total = f.shape[0]

    rows = total // _LANE
    rows8 = (rows // _SUBLANE) * _SUBLANE   # kernel processes a multiple of 8 rows
    main = rows8 * _LANE

    # Ragged tail (< 8*128 + 128 elements): negligible jnp work in the wrapper,
    # which avoids padding (and re-copying) the full arrays.  Emitted only when
    # needed (static shape check).
    if total > main:
        tf = f[main:].astype(jnp.float32)
        tr = r[main:].astype(jnp.float32)
        tmask = tr > 0.0
        tail_sum = jnp.sum(jnp.where(tmask, (tr - tf) ** 2, 0.0))
        tail_cnt = jnp.sum(tmask.astype(jnp.float32))
    else:
        tail_sum = jnp.float32(0.0)
        tail_cnt = jnp.float32(0.0)

    if rows8 == 0:
        ksum = jnp.float32(0.0)
        kcnt = jnp.float32(0.0)
    else:
        f2 = f[:main].reshape(rows8, _LANE)
        r2 = r[:main].reshape(rows8, _LANE)

        # Full-extent block for small inputs, otherwise 2048-row tiles.
        # Both choices are multiples of 8, so the in-kernel regroup is exact.
        block_rows = rows8 if rows8 <= _MAX_BLOCK_ROWS else _MAX_BLOCK_ROWS
        tiles_total = pl.cdiv(rows8, block_rows)
        num_parts = _num_tensorcores() if tiles_total >= 2 else 1
        num_parts = min(num_parts, tiles_total)
        tiles_per_part = pl.cdiv(tiles_total, num_parts)

        def in_map(p, i):
            # Clamp phantom trailing blocks (when tiles_total is not a multiple
            # of num_parts) onto the last valid block; their rows are masked
            # off in-kernel via the unclamped global row index.
            return (jnp.minimum(p * tiles_per_part + i, tiles_total - 1), 0)

        kernel = functools.partial(
            _irmse_partial_kernel,
            rows_total=rows8,
            tiles_per_part=tiles_per_part,
            block_rows=block_rows,
        )

        out = pl.pallas_call(
            kernel,
            out_shape=jax.ShapeDtypeStruct((num_parts, 2, _LANE), jnp.float32),
            grid_spec=pltpu.PrefetchScalarGridSpec(
                num_scalar_prefetch=0,
                grid=(num_parts, tiles_per_part),
                in_specs=[
                    pl.BlockSpec((block_rows, _LANE), in_map),
                    pl.BlockSpec((block_rows, _LANE), in_map),
                ],
                out_specs=pl.BlockSpec((1, 2, _LANE), lambda p, i: (p, 0, 0)),
                scratch_shapes=[
                    pltpu.VMEM((_SUBLANE, _LANE), jnp.float32),  # sq-err acc
                    pltpu.VMEM((_SUBLANE, _LANE), jnp.float32),  # count acc
                ],
            ),
            compiler_params=pltpu.CompilerParams(
                dimension_semantics=("parallel", "arbitrary"),
            ),
        )(f2, r2)

        ksum = jnp.sum(out[:, 0, 0])
        kcnt = jnp.sum(out[:, 1, 0])

    total_sum = ksum + tail_sum
    total_cnt = kcnt + tail_cnt
    # Matches PyTorch: if no element has real > 0 this yields NaN.
    return jnp.sqrt(total_sum / total_cnt + _EPS)


def _irmse_ref(fake, real):
    fake = fake.astype(jnp.float32)
    real = real.astype(jnp.float32)
    mask = real > 0
    n = jnp.sum(mask.astype(jnp.float32))
    s = jnp.sum(jnp.where(mask, (real - fake) ** 2, 0.0))
    return jnp.sqrt(s / n + _EPS)


if __name__ == "__main__":
    key = jax.random.PRNGKey(0)

    def check(shape, k, dtype=jnp.float32, rtol=1e-4):
        k1, k2 = jax.random.split(k)
        fake = jax.random.normal(k1, shape, dtype=jnp.float32).astype(dtype)
        # Mix of positive and non-positive values so the mask is non-trivial.
        real = jax.random.normal(k2, shape, dtype=jnp.float32).astype(dtype)
        loss = irmse(fake, real)
        jax.block_until_ready(loss)
        ref = _irmse_ref(fake, real)
        assert jnp.allclose(loss, ref, rtol=rtol, atol=1e-6), (
            shape, dtype, loss, ref)

    key, s1, s2, s3, s4, s5 = jax.random.split(key, 6)
    # Primary small NCHW case (as the PyTorch module would see it).
    check((2, 4, 16, 16), s1)
    # Ragged tail (flat size not a multiple of 8*128) handled in the wrapper.
    check((1, 3, 211, 211), s2)
    # Multi-tile: full interior tile path + partial edge tile path in-kernel.
    check((1, 5, 256, 256), s3)
    # Tiny input: pure wrapper-tail path (kernel not emitted).
    check((4, 4, 4, 4), s4)
    # bf16 inputs stream HBM->VMEM at native width; f32 math in-kernel.
    check((2, 4, 16, 16), s5, dtype=jnp.bfloat16, rtol=1e-3)

    print("KERNEL_OK")
</pallas_src>

<mosaic_0001>
module attributes {stable_mosaic.version = 11 : i64} {
  func.func @_irmse_partial_kernel(%arg0: i32, %arg1: i32, %arg2: memref<16x128xf32, #tpu.memory_space<vmem>>, %arg3: memref<16x128xf32, #tpu.memory_space<vmem>>, %arg4: memref<1x2x128xf32, #tpu.memory_space<vmem>>, %arg5: memref<8x128xf32, #tpu.memory_space<vmem>>, %arg6: memref<8x128xf32, #tpu.memory_space<vmem>>) attributes {dimension_semantics = [#tpu.dimension_semantics<parallel>, #tpu.dimension_semantics<arbitrary>], iteration_bounds = array<i64: 1, 1>, scalar_prefetch = 0 : i64, scratch_operands = 2 : i64, tpu.core_type = #tpu.core_type<tc>, window_params = [{transform_indices = @transform_0, window_bounds = array<i64: 16, 128>}, {transform_indices = @transform_1, window_bounds = array<i64: 16, 128>}, {transform_indices = @transform_2, window_bounds = array<i64: 1, 2, 128>}]} {
    %c0_i32 = arith.constant 0 : i32
    %0 = arith.cmpi eq, %arg1, %c0_i32 : i32
    %1 = arith.extui %0 : i1 to i32
    %c0_i32_0 = arith.constant 0 : i32
    %2 = arith.cmpi ne, %1, %c0_i32_0 : i32
    scf.if %2 {
      %cst_10 = arith.constant 0.000000e+00 : f32
      %21 = vector.broadcast %cst_10 : f32 to vector<8x128xf32>
      %c0_11 = arith.constant 0 : index
      %c0_12 = arith.constant 0 : index
      %22 = vector.load %arg5[%c0_11, %c0_12] : memref<8x128xf32, #tpu.memory_space<vmem>>, vector<8x128xf32>
      tpu.vector_store %arg5[%c0_11, %c0_12], %21 {strides = array<i32>} : memref<8x128xf32, #tpu.memory_space<vmem>>, vector<8x128xf32>,
      %cst_13 = arith.constant 0.000000e+00 : f32
      %23 = vector.broadcast %cst_13 : f32 to vector<8x128xf32>
      %c0_14 = arith.constant 0 : index
      %c0_15 = arith.constant 0 : index
      %24 = vector.load %arg6[%c0_14, %c0_15] : memref<8x128xf32, #tpu.memory_space<vmem>>, vector<8x128xf32>
      tpu.vector_store %arg6[%c0_14, %c0_15], %23 {strides = array<i32>} : memref<8x128xf32, #tpu.memory_space<vmem>>, vector<8x128xf32>,
    } else {
    }
    %c0 = arith.constant 0 : index
    %c0_1 = arith.constant 0 : index
    %3 = vector.load %arg3[%c0, %c0_1] : memref<16x128xf32, #tpu.memory_space<vmem>>, vector<16x128xf32>
    %c0_2 = arith.constant 0 : index
    %c0_3 = arith.constant 0 : index
    %4 = vector.load %arg2[%c0_2, %c0_3] : memref<16x128xf32, #tpu.memory_space<vmem>>, vector<16x128xf32>
    %5 = arith.subf %3, %4 : vector<16x128xf32>
    %cst = arith.constant 0.000000e+00 : f32
    %6 = vector.broadcast %cst : f32 to vector<16x128xf32>
    %7 = arith.cmpf ogt, %3, %6 : vector<16x128xf32>
    %c1_i32 = arith.constant 1 : i32
    %8 = arith.muli %arg0, %c1_i32 : i32
    %9 = arith.addi %8, %arg1 : i32
    %c16_i32 = arith.constant 16 : i32
    %10 = arith.muli %9, %c16_i32 : i32
    %c16_i32_4 = arith.constant 16 : i32
    %11 = arith.addi %10, %c16_i32_4 : i32
    %c16_i32_5 = arith.constant 16 : i32
    %12 = arith.cmpi sle, %11, %c16_i32_5 : i32
    %13 = arith.extui %12 : i1 to i32
    %c0_i32_6 = arith.constant 0 : i32
    %14 = arith.cmpi ne, %13, %c0_i32_6 : i32
    scf.if %14 {
      %21 = arith.mulf %5, %5 : vector<16x128xf32>
      %cst_10 = arith.constant 0.000000e+00 : f32
      %22 = vector.broadcast %cst_10 : f32 to vector<16x128xf32>
      %23 = arith.select %7, %21, %22 : vector<16x128xi1>, vector<16x128xf32>
      %24 = arith.extui %7 : vector<16x128xi1> to vector<16x128xi32>
      %25 = arith.sitofp %24 : vector<16x128xi32> to vector<16x128xf32>
      %c0_11 = arith.constant 0 : index
      %c0_12 = arith.constant 0 : index
      %26 = vector.load %arg5[%c0_11, %c0_12] : memref<8x128xf32, #tpu.memory_space<vmem>>, vector<8x128xf32>
      %27 = vector.shape_cast %23 : vector<16x128xf32> to vector<2x8x128xf32>
      %cst_13 = arith.constant dense<0.000000e+00> : vector<8x128xf32>
      %28 = vector.multi_reduction <add>, %27, %cst_13 [0] : vector<2x8x128xf32> to vector<8x128xf32>
      %29 = arith.addf %26, %28 : vector<8x128xf32>
      %c0_14 = arith.constant 0 : index
      %c0_15 = arith.constant 0 : index
      %30 = vector.load %arg5[%c0_14, %c0_15] : memref<8x128xf32, #tpu.memory_space<vmem>>, vector<8x128xf32>
      tpu.vector_store %arg5[%c0_14, %c0_15], %29 {strides = array<i32>} : memref<8x128xf32, #tpu.memory_space<vmem>>, vector<8x128xf32>,
      %c0_16 = arith.constant 0 : index
      %c0_17 = arith.constant 0 : index
      %31 = vector.load %arg6[%c0_16, %c0_17] : memref<8x128xf32, #tpu.memory_space<vmem>>, vector<8x128xf32>
      %32 = vector.shape_cast %25 : vector<16x128xf32> to vector<2x8x128xf32>
      %cst_18 = arith.constant dense<0.000000e+00> : vector<8x128xf32>
      %33 = vector.multi_reduction <add>, %32, %cst_18 [0] : vector<2x8x128xf32> to vector<8x128xf32>
      %34 = arith.addf %31, %33 : vector<8x128xf32>
      %c0_19 = arith.constant 0 : index
      %c0_20 = arith.constant 0 : index
      %35 = vector.load %arg6[%c0_19, %c0_20] : memref<8x128xf32, #tpu.memory_space<vmem>>, vector<8x128xf32>
      tpu.vector_store %arg6[%c0_19, %c0_20], %34 {strides = array<i32>} : memref<8x128xf32, #tpu.memory_space<vmem>>, vector<8x128xf32>,
    } else {
    }
    %true = arith.constant true
    %15 = arith.xori %12, %true : i1
    %16 = arith.extui %15 : i1 to i32
    %c0_i32_7 = arith.constant 0 : i32
    %17 = arith.cmpi ne, %16, %c0_i32_7 : i32
    scf.if %17 {
      %21 = tpu.iota {dimensions = array<i32: 0>} : vector<16x128xi32>
      %22 = vector.broadcast %10 : i32 to vector<16x128xi32>
      %23 = arith.addi %22, %21 : vector<16x128xi32>
      %c16_i32_10 = arith.constant 16 : i32
      %24 = vector.broadcast %c16_i32_10 : i32 to vector<16x128xi32>
      %25 = arith.cmpi slt, %23, %24 : vector<16x128xi32>
      %26 = arith.andi %7, %25 : vector<16x128xi1>
      %27 = arith.mulf %5, %5 : vector<16x128xf32>
      %cst_11 = arith.constant 0.000000e+00 : f32
      %28 = vector.broadcast %cst_11 : f32 to vector<16x128xf32>
      %29 = arith.select %26, %27, %28 : vector<16x128xi1>, vector<16x128xf32>
      %30 = arith.extui %26 : vector<16x128xi1> to vector<16x128xi32>
      %31 = arith.sitofp %30 : vector<16x128xi32> to vector<16x128xf32>
      %c0_12 = arith.constant 0 : index
      %c0_13 = arith.constant 0 : index
      %32 = vector.load %arg5[%c0_12, %c0_13] : memref<8x128xf32, #tpu.memory_space<vmem>>, vector<8x128xf32>
      %33 = vector.shape_cast %29 : vector<16x128xf32> to vector<2x8x128xf32>
      %cst_14 = arith.constant dense<0.000000e+00> : vector<8x128xf32>
      %34 = vector.multi_reduction <add>, %33, %cst_14 [0] : vector<2x8x128xf32> to vector<8x128xf32>
      %35 = arith.addf %32, %34 : vector<8x128xf32>
      %c0_15 = arith.constant 0 : index
      %c0_16 = arith.constant 0 : index
      %36 = vector.load %arg5[%c0_15, %c0_16] : memref<8x128xf32, #tpu.memory_space<vmem>>, vector<8x128xf32>
      tpu.vector_store %arg5[%c0_15, %c0_16], %35 {strides = array<i32>} : memref<8x128xf32, #tpu.memory_space<vmem>>, vector<8x128xf32>,
      %c0_17 = arith.constant 0 : index
      %c0_18 = arith.constant 0 : index
      %37 = vector.load %arg6[%c0_17, %c0_18] : memref<8x128xf32, #tpu.memory_space<vmem>>, vector<8x128xf32>
      %38 = vector.shape_cast %31 : vector<16x128xf32> to vector<2x8x128xf32>
      %cst_19 = arith.constant dense<0.000000e+00> : vector<8x128xf32>
      %39 = vector.multi_reduction <add>, %38, %cst_19 [0] : vector<2x8x128xf32> to vector<8x128xf32>
      %40 = arith.addf %37, %39 : vector<8x128xf32>
      %c0_20 = arith.constant 0 : index
      %c0_21 = arith.constant 0 : index
      %41 = vector.load %arg6[%c0_20, %c0_21] : memref<8x128xf32, #tpu.memory_space<vmem>>, vector<8x128xf32>
      tpu.vector_store %arg6[%c0_20, %c0_21], %40 {strides = array<i32>} : memref<8x128xf32, #tpu.memory_space<vmem>>, vector<8x128xf32>,
    } else {
    }
    %c0_i32_8 = arith.constant 0 : i32
    %18 = arith.cmpi eq, %arg1, %c0_i32_8 : i32
    %19 = arith.extui %18 : i1 to i32
    %c0_i32_9 = arith.constant 0 : i32
    %20 = arith.cmpi ne, %19, %c0_i32_9 : i32
    scf.if %20 {
      %c0_10 = arith.constant 0 : index
      %c0_11 = arith.constant 0 : index
      %21 = vector.load %arg5[%c0_10, %c0_11] : memref<8x128xf32, #tpu.memory_space<vmem>>, vector<8x128xf32>
      %22 = vector.shape_cast %21 : vector<8x128xf32> to vector<1x8x128xf32>
      %cst_12 = arith.constant dense<0.000000e+00> : vector<1xf32>
      %23 = vector.multi_reduction <add>, %22, %cst_12 [1, 2] : vector<1x8x128xf32> to vector<1xf32>
      %24 = vector.shape_cast %23 : vector<1xf32> to vector<1x1x1xf32>
      %25 = vector.extract %24[0, 0, 0] : f32 from vector<1x1x1xf32>
      %c0_13 = arith.constant 0 : index
      %c0_14 = arith.constant 0 : index
      %26 = vector.load %arg6[%c0_13, %c0_14] : memref<8x128xf32, #tpu.memory_space<vmem>>, vector<8x128xf32>
      %27 = vector.shape_cast %26 : vector<8x128xf32> to vector<1x8x128xf32>
      %cst_15 = arith.constant dense<0.000000e+00> : vector<1xf32>
      %28 = vector.multi_reduction <add>, %27, %cst_15 [1, 2] : vector<1x8x128xf32> to vector<1xf32>
      %29 = vector.shape_cast %28 : vector<1xf32> to vector<1x1x1xf32>
      %30 = vector.extract %29[0, 0, 0] : f32 from vector<1x1x1xf32>
      %31 = tpu.iota {dimensions = array<i32: 1>} : vector<1x2x128xi32>
      %c0_i32_16 = arith.constant 0 : i32
      %32 = vector.broadcast %c0_i32_16 : i32 to vector<1x2x128xi32>
      %33 = arith.cmpi eq, %31, %32 : vector<1x2x128xi32>
      %34 = vector.broadcast %25 : f32 to vector<1x2x128xf32>
      %35 = vector.broadcast %30 : f32 to vector<1x2x128xf32>
      %36 = arith.select %33, %34, %35 : vector<1x2x128xi1>, vector<1x2x128xf32>
      %c0_17 = arith.constant 0 : index
      %c0_18 = arith.constant 0 : index
      %c0_19 = arith.constant 0 : index
      %37 = vector.load %arg4[%c0_17, %c0_18, %c0_19] : memref<1x2x128xf32, #tpu.memory_space<vmem>>, vector<1x2x128xf32>
      tpu.vector_store %arg4[%c0_17, %c0_18, %c0_19], %36 {strides = array<i32>} : memref<1x2x128xf32, #tpu.memory_space<vmem>>, vector<1x2x128xf32>,
    } else {
    }
    return
  }
  func.func @transform_0(%arg0: i32, %arg1: i32) -> (i32, i32) {
    %c1_i32 = arith.constant 1 : i32
    %0 = arith.muli %arg0, %c1_i32 : i32
    %1 = arith.addi %0, %arg1 : i32
    %c0_i32 = arith.constant 0 : i32
    %2 = arith.minsi %1, %c0_i32 : i32
    %c0_i32_0 = arith.constant 0 : i32
    %c0_i32_1 = arith.constant 0 : i32
    return %2, %c0_i32_0 : i32, i32
  }
  func.func @transform_1(%arg0: i32, %arg1: i32) -> (i32, i32) {
    %c1_i32 = arith.constant 1 : i32
    %0 = arith.muli %arg0, %c1_i32 : i32
    %1 = arith.addi %0, %arg1 : i32
    %c0_i32 = arith.constant 0 : i32
    %2 = arith.minsi %1, %c0_i32 : i32
    %c0_i32_0 = arith.constant 0 : i32
    %c0_i32_1 = arith.constant 0 : i32
    return %2, %c0_i32_0 : i32, i32
  }
  func.func @transform_2(%arg0: i32, %arg1: i32) -> (i32, i32, i32) {
    %c0_i32 = arith.constant 0 : i32
    %c0_i32_0 = arith.constant 0 : i32
    %c0_i32_1 = arith.constant 0 : i32
    return %arg0, %c0_i32, %c0_i32_0 : i32, i32, i32
  }
}

</mosaic_0001>

<llo_original>
// kernel: irmse.1
$region0: #{irmse.1}
  #allocation0 [shape = 'u32[]', space=smem, size = 0x4, offset = 0x4, fixed_abs, tag = 'smem constant byte address 0x4 - core index']
  #allocation1 [shape = 'u32[144,128]{1,0:T(1,128)}', space=vmem, size = 0x12000, scoped, tag = 'internal scratch']
  #allocation2 [shape = 'f32[8,128]{1,0:T(8,128)}', space=vmem, size = 0x1000, scoped, tag = 'scratch operand']
  #allocation3 [shape = 'f32[8,128]{1,0:T(8,128)}', space=vmem, size = 0x1000, scoped, tag = 'scratch operand']
  %s0 = inlined_call_operand.vmem [shape: f32[16,128], index: 0, kind: input, shape index: {}]
  %s1 = inlined_call_operand.vmem [shape: f32[16,128], index: 1, kind: input, shape index: {}]
  %s2 = inlined_call_operand.vmem [shape: f32[1,2,128], index: 2, kind: output, shape index: {}]
  %s3 = sld [smem:[#allocation0]]
  $region34: #{irmse.1} parent=0
    _
  %s5 = ssub.s32 1, %s3
  %s6 = scalar_select 0, %s5, %s3
  // Predicated region
  $region2: #{irmse.1} parent=0 // pred_check
    _
  $region3: #{irmse.1} parent=0 // pred_check_branch
    %8 = sbr.rel (0) target = $region5
  $region4: #{irmse.1} parent=0 // pred_region
    %s9 = sadd.s32 0, 0
    %p10 = scmp.lt.s32.totalorder %s9, 0
    %s11 = scalar_select %p10, %s9, 0
    %s12 = smul.u32 2, %s11
    %p13 = scmp.lt.s32.totalorder %s12, 1
    %s14 = scalar_select %p13, %s12, 1
    %s15 = smul.addr %s14, 8
    %s16 = scalar_lea.vmem %s0, %s15
    %s17 = sadd.s32 0, 0
    %p18 = scmp.lt.s32.totalorder %s17, 0
    %s19 = scalar_select %p18, %s17, 0
    %s20 = smul.u32 2, %s19
  $region5: #{irmse.1} parent=0 // pred_fallthru
    _
  // Predicated region
  $region6: #{irmse.1} parent=0 // pred_check
    _
  $region7: #{irmse.1} parent=0 // pred_check_branch
    %22 = sbr.rel (0) target = $region9
  $region8: #{irmse.1} parent=0 // pred_region
    %s23 = sadd.s32 0, 0
    %p24 = scmp.lt.s32.totalorder %s23, 0
    %s25 = scalar_select %p24, %s23, 0
    %s26 = smul.u32 2, %s25
    %p27 = scmp.lt.s32.totalorder %s26, 1
    %s28 = scalar_select %p27, %s26, 1
    %s29 = smul.addr %s28, 8
    %s30 = scalar_lea.vmem %s1, %s29
    %s31 = sadd.s32 0, 0
    %p32 = scmp.lt.s32.totalorder %s31, 0
    %s33 = scalar_select %p32, %s31, 0
    %s34 = smul.u32 2, %s33
  $region9: #{irmse.1} parent=0 // pred_fallthru
    _
  %s35 = sadd.s32 0, 0
  %p36 = scmp.lt.s32.totalorder %s35, 0
  %s37 = scalar_select %p36, %s35, 0
  %s38 = smul.u32 2, %s37
  %p39 = scmp.lt.s32.totalorder %s38, 1
  %s40 = scalar_select %p39, %s38, 1
  %s41 = smul.addr %s40, 8
  %s42 = scalar_lea.vmem %s0, %s41
  %s43 = sadd.s32 0, 0
  %p44 = scmp.lt.s32.totalorder %s43, 0
  %s45 = scalar_select %p44, %s43, 0
  %s46 = smul.u32 2, %s45
  %p47 = scmp.lt.s32.totalorder %s46, 1
  %s48 = scalar_select %p47, %s46, 1
  %s49 = smul.addr %s48, 8
  %s50 = scalar_lea.vmem %s1, %s49
  %s51 = sadd.s32 0, 0
  %p52 = scmp.lt.s32.totalorder %s51, 0
  %s53 = scalar_select %p52, %s51, 0
  %s54 = smul.u32 2, %s53
  %p55 = scmp.lt.s32.totalorder %s54, 1
  %s56 = scalar_select %p55, %s54, 1
  %s57 = smul.addr %s56, 8
  %s58 = scalar_lea.vmem %s0, %s57
  %s59 = sadd.s32 0, 0
  %p60 = scmp.lt.s32.totalorder %s59, 0
  %s61 = scalar_select %p60, %s59, 0
  %s62 = smul.u32 2, %s61
  %s63 = sadd.s32 0, 0
  %p64 = scmp.lt.s32.totalorder %s63, 0
  %s65 = scalar_select %p64, %s63, 0
  %s66 = smul.u32 2, %s65
  %p67 = scmp.lt.s32.totalorder %s66, 1
  %s68 = scalar_select %p67, %s66, 1
  %s69 = smul.addr %s68, 8
  %s70 = scalar_lea.vmem %s1, %s69
  %s71 = sadd.s32 0, 0
  %p72 = scmp.lt.s32.totalorder %s71, 0
  %s73 = scalar_select %p72, %s71, 0
  %s74 = smul.u32 2, %s73
  %p75 = scmp.eq.s32.totalorder 0, 0
  // Predicated region
  $region10: #{irmse.1} parent=0 // pred_check
    %p76 = pneg %p75
  $region11: #{irmse.1} parent=0 // pred_check_branch
    %78 = sbr.rel (%p76) target = $region13
  $region12: #{irmse.1} parent=0 // pred_region
    %79 = vst [vmem:[#allocation2] sm:$0xff] 0.0
    %80 = vst [vmem:[#allocation3] sm:$0xff] 0.0
  $region13: #{irmse.1} parent=0 // pred_fallthru
    _
  %v81 = vld [vmem:[%s70] sm:$0xff]
  %v82 = vld [vmem:[%s70 + $0x8] sm:$0xff]
  %v83 = vld [vmem:[%s58] sm:$0xff]
  %v84 = vld [vmem:[%s58 + $0x8] sm:$0xff]
  %v85 = vsub.f32 %v81, %v83
  %v86 = vsub.f32 %v82, %v84
  %vm87 = vcmp.gt.f32.partialorder %v81, 0.0
  %vm88 = vcmp.gt.f32.partialorder %v82, 0.0
  %s89 = sadd.s32 0, 0
  %s90 = smul.u32 %s89, 16
  %s91 = sadd.s32 %s90, 16
  %p92 = scmp.le.s32.totalorder %s91, 16
  // Predicated region
  $region14: #{irmse.1} parent=0 // pred_check
    %p93 = pneg %p92
  $region15: #{irmse.1} parent=0 // pred_check_branch
    %95 = sbr.rel (%p93) target = $region17
  $region16: #{irmse.1} parent=0 // pred_region
    %v96 = vmul.f32 %v85, %v85
    %v97 = vmul.f32 %v86, %v86
    %v98 = vsel %vm87, %v96, 0.0
    %v99 = vsel %vm88, %v97, 0.0
    %v100 = vsel %vm87, 1, 0
    %v101 = vsel %vm88, 1, 0
    %v102 = vcvt.s32.f32 %v100
    %v103 = vcvt.s32.f32 %v101
    %v104 = vld [vmem:[#allocation2] sm:$0xff]
    %v105 = vadd.f32 %v98, %v99
    %v106 = vadd.f32 %v104, %v105
    %107 = vst [vmem:[#allocation2] sm:$0xff] %v106
    %v108 = vld [vmem:[#allocation3] sm:$0xff]
    %v109 = vadd.f32 %v102, %v103
    %v110 = vadd.f32 %v108, %v109
    %111 = vst [vmem:[#allocation3] sm:$0xff] %v110
  $region17: #{irmse.1} parent=0 // pred_fallthru
    _
  %p112 = scmp.gt.s32.totalorder %s91, 16
  // Predicated region
  $region18: #{irmse.1} parent=0 // pred_check
    %p113 = pneg %p112
  $region19: #{irmse.1} parent=0 // pred_check_branch
    %115 = sbr.rel (%p113) target = $region21
  $region20: #{irmse.1} parent=0 // pred_region
    %v116 = vlaneseq
    %v117 = vshrl.u32 %v116, 7
    %v118 = vadd.s32 %v117, 8
    %v119 = vstv %s90
    %v120 = vadd.s32 %v119, %v117
    %v121 = vadd.s32 %v119, %v118
    %vm122 = vcmp.lt.s32.totalorder %v120, 16
    %vm123 = vcmp.lt.s32.totalorder %v121, 16
    %vm124 = vmand %vm87, %vm122
    %vm125 = vmand %vm88, %vm123
    %v126 = vmul.f32 %v85, %v85
    %v127 = vmul.f32 %v86, %v86
    %v128 = vsel %vm124, %v126, 0.0
    %v129 = vsel %vm125, %v127, 0.0
    %v130 = vsel %vm124, 1, 0
    %v131 = vsel %vm125, 1, 0
    %v132 = vcvt.s32.f32 %v130
    %v133 = vcvt.s32.f32 %v131
    %v134 = vld [vmem:[#allocation2] sm:$0xff]
    %v135 = vadd.f32 %v128, %v129
    %v136 = vadd.f32 %v134, %v135
    %137 = vst [vmem:[#allocation2] sm:$0xff] %v136
    %v138 = vld [vmem:[#allocation3] sm:$0xff]
    %v139 = vadd.f32 %v132, %v133
    %v140 = vadd.f32 %v138, %v139
    %141 = vst [vmem:[#allocation3] sm:$0xff] %v140
  $region21: #{irmse.1} parent=0 // pred_fallthru
    _
  // Predicated region
  $region22: #{irmse.1} parent=0 // pred_check
    %p142 = pneg %p75
  $region23: #{irmse.1} parent=0 // pred_check_branch
    %144 = sbr.rel (%p142) target = $region25
  $region24: #{irmse.1} parent=0 // pred_region
    %v145 = vld [vmem:[#allocation2] sm:$0xff]
    %146 = vadd.xlane.f32.xlu0 %v145
    %v147 = vpop.xlane.xlu0 %146
    %v148 = vrot.slane %v147, 4
    %v149 = vadd.f32 %v147, %v148
    %v150 = vrot.slane %v149, 2
    %v151 = vadd.f32 %v149, %v150
    %v152 = vrot.slane %v151, 1
    %v153 = vadd.f32 %v151, %v152
    %s154 = vtos %v153
    %v155 = vld [vmem:[#allocation3] sm:$0xff]
    %156 = vadd.xlane.f32.xlu0 %v155
    %v157 = vpop.xlane.xlu0 %156
    %v158 = vrot.slane %v157, 4
    %v159 = vadd.f32 %v157, %v158
    %v160 = vrot.slane %v159, 2
    %v161 = vadd.f32 %v159, %v160
    %v162 = vrot.slane %v161, 1
    %v163 = vadd.f32 %v161, %v162
    %s164 = vtos %v163
    %v165 = vlaneseq
    %v166 = vshrl.u32 %v165, 7
    %vm167 = vcmp.eq.s32.totalorder %v166, 0
    %v168 = vstv %s154
    %v169 = vstv %s164
    %v170 = vsel %vm167, %v168, %v169
    %171 = vst [vmem:[%s2] sm:$0x3] %v170
  $region25: #{irmse.1} parent=0 // pred_fallthru
    _
  // Predicated region
  $region26: #{irmse.1} parent=0 // pred_check
    _
  $region27: #{irmse.1} parent=0 // pred_check_branch
    %173 = sbr.rel (0) target = $region29
  $region28: #{irmse.1} parent=0 // pred_region
    _
  $region29: #{irmse.1} parent=0 // pred_fallthru
    _
  // Predicated region
  $region30: #{irmse.1} parent=0 // pred_check
    _
  $region31: #{irmse.1} parent=0 // pred_check_branch
    %175 = sbr.rel (0) target = $region33
  $region32: #{irmse.1} parent=0 // pred_region
    _
  $region33: #{irmse.1} parent=0 // pred_fallthru
    _

</llo_original>
